<compile_context>
chip_gen: v6e
topology: v6e:2x2x1
jax: 0.10.0
libtpu: 0.0.40
codegen_flags: <defaults>
</compile_context>

<pallas_src>
import jax
import jax.numpy as jnp
from jax.experimental import pallas as pl
from jax.experimental.pallas import tpu as pltpu


def _round_up(n, m):
    return ((n + m - 1) // m) * m


def _pad_to(x, target_shape):
    pads = [(0, t - s) for s, t in zip(x.shape, target_shape)]
    if all(p == (0, 0) for p in pads):
        return x
    return jnp.pad(x, pads)


def char_rnn_kernel(emb_ref, h0_ref, wih_ref, whh_ref, brnn_ref,
                    w1_ref, b1_ref, w2_ref, b2_ref,
                    out_ref, hT_ref,
                    hseq_ref):
    """Full CharRNN forward in VMEM.

    emb_ref  : (T*Bp, E)    time-major embedded inputs, rows ordered (t, b)
    h0_ref   : (Bp, Hp)     initial hidden state (padded)
    wih_ref  : (E, Hp)      W_ih^T (padded)
    whh_ref  : (Hp, Hp)     W_hh^T (padded)
    brnn_ref : (1, Hp)      b_ih + b_hh (padded)
    w1_ref   : (Hp, H2p)    fc1 weight^T (padded)
    b1_ref   : (1, H2p)
    w2_ref   : (H2p, Op)    fc2 weight^T (padded)
    b2_ref   : (1, Op)
    out_ref  : (T*Bp, Op)   head output, rows ordered (t, b), lane-dense
    hT_ref   : (Bp, Hp)     final hidden state (padded)
    hseq_ref : VMEM scratch (T, Bp, Hp) -- per-step hidden states for the head
    """
    T, Bp, Hp = hseq_ref.shape

    # ---- Phase 1: hoisted input projection, bias folded in once (no
    # re-broadcast inside the serial loop).  Kept in vregs (no scratch store).
    xproj = (jnp.dot(emb_ref[...], wih_ref[...],
                     preferred_element_type=jnp.float32)
             + brnn_ref[...])                        # (T*Bp, Hp)

    # ---- Phase 2: serial recurrence.  T is static and small, so the loop is
    # fully unrolled at trace time: static sublane-aligned slices of xproj
    # (Bp is a multiple of 8), static stores into hseq, h carried in vregs.
    whh = whh_ref[...]
    h = h0_ref[...]
    for t in range(T):
        xp_t = xproj[t * Bp:(t + 1) * Bp, :]         # (Bp, Hp), static slice
        h = jnp.tanh(xp_t
                     + jnp.dot(h, whh, preferred_element_type=jnp.float32))
        hseq_ref[t] = h
    hT_ref[...] = h

    # ---- Phase 3: fc1 -> relu -> fc2 over all T*Bp rows at once.
    hs = hseq_ref[...].reshape(T * Bp, Hp)
    z = jnp.maximum(
        jnp.dot(hs, w1_ref[...], preferred_element_type=jnp.float32)
        + b1_ref[...], 0.0)
    out_ref[...] = (jnp.dot(z, w2_ref[...], preferred_element_type=jnp.float32)
                    + b2_ref[...])


def char_rnn_forward(tokens, hidden, params):
    """JAX wrapper reproducing CharRNN.forward(input, hidden).

    tokens : (B, T) int32
    hidden : (num_layers=1, B, H) float32
    returns (output (B*T, O), hidden (1, B, H))
    """
    emb_table = params["embedding"]          # (V, E)
    w_ih_t = params["w_ih_t"]                # (E, H)
    w_hh_t = params["w_hh_t"]                # (H, H)
    b_rnn = params["b_rnn"]                  # (1, H)
    w1_t = params["w1_t"]                    # (H, H2)
    b1 = params["b1"]                        # (1, H2)
    w2_t = params["w2_t"]                    # (H2, O)
    b2 = params["b2"]                        # (1, O)

    B, T = tokens.shape
    E = emb_table.shape[1]
    H = w_hh_t.shape[0]
    H2 = w1_t.shape[1]
    O = w2_t.shape[1]

    # Padded (sublane / lane dense) dims.
    Bp = _round_up(B, 8)
    Hp = _round_up(H, 128)
    H2p = _round_up(H2, 128)
    Op = _round_up(O, 128)

    # Embedding lookup directly in time-major order (no separate transpose),
    # then pad batch and flatten to the (T*Bp, E) row order the kernel expects.
    embeds_tm = jnp.take(emb_table, tokens.T, axis=0)      # (T, B, E)
    embeds_tm = _pad_to(embeds_tm, (T, Bp, E))             # (T, Bp, E)
    emb2d = embeds_tm.reshape(T * Bp, E)

    h0 = _pad_to(hidden[0], (Bp, Hp))                      # (Bp, Hp)
    wih = _pad_to(w_ih_t, (E, Hp))
    whh = _pad_to(w_hh_t, (Hp, Hp))
    brnn = _pad_to(b_rnn, (1, Hp))
    w1 = _pad_to(w1_t, (Hp, H2p))
    b1p = _pad_to(b1, (1, H2p))
    w2 = _pad_to(w2_t, (H2p, Op))
    b2p = _pad_to(b2, (1, Op))

    vmem = pl.BlockSpec(memory_space=pltpu.MemorySpace.VMEM)

    out2d, hT = pl.pallas_call(
        char_rnn_kernel,
        out_shape=(jax.ShapeDtypeStruct((T * Bp, Op), jnp.float32),
                   jax.ShapeDtypeStruct((Bp, Hp), jnp.float32)),
        in_specs=[vmem] * 9,
        out_specs=(vmem, vmem),
        scratch_shapes=[pltpu.VMEM((T, Bp, Hp), jnp.float32)],  # hseq
    )(emb2d, h0, wih, whh, brnn, w1, b1p, w2, b2p)

    # (T*Bp, Op) -> (T, B, O) -> (B, T, O) -> (B*T, O), matching PyTorch's
    # rnn_output.contiguous().view(-1, hidden_size) row order (batch_first).
    out = out2d.reshape(T, Bp, Op)[:, :B, :O]
    output = jnp.transpose(out, (1, 0, 2)).reshape(B * T, O)
    hidden_out = hT[:B, :H][None, :, :]                    # (1, B, H)
    return output, hidden_out


def init_params(key, vocab, E, H, O):
    H2 = H // 2
    ks = jax.random.split(key, 9)
    scale = 0.1
    return {
        "embedding": jax.random.normal(ks[0], (vocab, E), jnp.float32) * scale,
        "w_ih_t": jax.random.normal(ks[1], (E, H), jnp.float32) * scale,
        "w_hh_t": jax.random.normal(ks[2], (H, H), jnp.float32) * scale,
        "b_rnn": (jax.random.normal(ks[3], (1, H), jnp.float32) * scale
                  + jax.random.normal(ks[4], (1, H), jnp.float32) * scale),  # b_ih + b_hh
        "w1_t": jax.random.normal(ks[5], (H, H2), jnp.float32) * scale,
        "b1": jax.random.normal(ks[6], (1, H2), jnp.float32) * scale,
        "w2_t": jax.random.normal(ks[7], (H2, O), jnp.float32) * scale,
        "b2": jax.random.normal(ks[8], (1, O), jnp.float32) * scale,
    }


def reference_forward(tokens, hidden, params):
    """Pure-JAX reference (mirrors PyTorch semantics) for correctness check."""
    embeds = jnp.take(params["embedding"], tokens, axis=0)  # (B, T, E)
    B, T, _ = embeds.shape
    h = hidden[0]
    hs = []
    for t in range(T):
        h = jnp.tanh(embeds[:, t, :] @ params["w_ih_t"]
                     + h @ params["w_hh_t"] + params["b_rnn"])
        hs.append(h)
    rnn_out = jnp.stack(hs, axis=1)                         # (B, T, H)
    x = rnn_out.reshape(B * T, -1)
    x = jnp.maximum(x @ params["w1_t"] + params["b1"], 0.0)
    x = x @ params["w2_t"] + params["b2"]
    return x, h[None, :, :]


if __name__ == "__main__":
    # Small shapes consistent with the module.
    B, T = 2, 8
    vocab = 16          # input_size
    E = 32              # embedding_dim
    H = 32              # hidden_size
    O = 16              # output_size

    key = jax.random.PRNGKey(0)
    kp, kt = jax.random.split(key)
    params = init_params(kp, vocab, E, H, O)

    tokens = jax.random.randint(kt, (B, T), 0, vocab, dtype=jnp.int32)
    hidden0 = jnp.zeros((1, B, H), jnp.float32)             # init_hidden(batch_size)

    out, hT = char_rnn_forward(tokens, hidden0, params)
    out = jax.block_until_ready(out)
    hT = jax.block_until_ready(hT)

    # Sanity check against pure-JAX reference.
    ref_out, ref_hT = reference_forward(tokens, hidden0, params)
    assert out.shape == (B * T, O)
    assert hT.shape == (1, B, H)
    assert jnp.allclose(out, ref_out, atol=1e-4, rtol=1e-4)
    assert jnp.allclose(hT, ref_hT, atol=1e-4, rtol=1e-4)

    print("KERNEL_OK")
</pallas_src>

<mosaic_0001>
module attributes {stable_mosaic.version = 11 : i64} {
  func.func @char_rnn_kernel(%arg0: memref<64x32xf32, #tpu.memory_space<vmem>>, %arg1: memref<8x128xf32, #tpu.memory_space<vmem>>, %arg2: memref<32x128xf32, #tpu.memory_space<vmem>>, %arg3: memref<128x128xf32, #tpu.memory_space<vmem>>, %arg4: memref<1x128xf32, #tpu.memory_space<vmem>>, %arg5: memref<128x128xf32, #tpu.memory_space<vmem>>, %arg6: memref<1x128xf32, #tpu.memory_space<vmem>>, %arg7: memref<128x128xf32, #tpu.memory_space<vmem>>, %arg8: memref<1x128xf32, #tpu.memory_space<vmem>>, %arg9: memref<64x128xf32, #tpu.memory_space<vmem>>, %arg10: memref<8x128xf32, #tpu.memory_space<vmem>>, %arg11: memref<8x8x128xf32, #tpu.memory_space<vmem>>) attributes {dimension_semantics = [], scalar_prefetch = 0 : i64, scratch_operands = 1 : i64, tpu.core_type = #tpu.core_type<tc>} {
    %c0 = arith.constant 0 : index
    %c0_0 = arith.constant 0 : index
    %0 = vector.load %arg0[%c0, %c0_0] : memref<64x32xf32, #tpu.memory_space<vmem>>, vector<64x32xf32>
    %c0_1 = arith.constant 0 : index
    %c0_2 = arith.constant 0 : index
    %1 = vector.load %arg2[%c0_1, %c0_2] : memref<32x128xf32, #tpu.memory_space<vmem>>, vector<32x128xf32>
    %cst = arith.constant dense<0.000000e+00> : vector<64x128xf32>
    %2 = tpu.matmul %0, %1, %cst {dimension_numbers = #tpu.dot_dimension_numbers<[1], [0], [0], [1], [0, 0, 1, 1], [], []>} : vector<64x32xf32>, vector<32x128xf32>, vector<64x128xf32> -> vector<64x128xf32>
    %c0_3 = arith.constant 0 : index
    %c0_4 = arith.constant 0 : index
    %3 = vector.load %arg4[%c0_3, %c0_4] : memref<1x128xf32, #tpu.memory_space<vmem>>, vector<1x128xf32>
    %4 = vector.broadcast %3 : vector<1x128xf32> to vector<64x128xf32>
    %5 = arith.addf %2, %4 : vector<64x128xf32>
    %c0_5 = arith.constant 0 : index
    %c0_6 = arith.constant 0 : index
    %6 = vector.load %arg3[%c0_5, %c0_6] : memref<128x128xf32, #tpu.memory_space<vmem>>, vector<128x128xf32>
    %c0_7 = arith.constant 0 : index
    %c0_8 = arith.constant 0 : index
    %7 = vector.load %arg1[%c0_7, %c0_8] : memref<8x128xf32, #tpu.memory_space<vmem>>, vector<8x128xf32>
    %8 = vector.extract_strided_slice %5 {offsets = [0, 0], sizes = [8, 128], strides = [1, 1]} : vector<64x128xf32> to vector<8x128xf32>
    %cst_9 = arith.constant dense<0.000000e+00> : vector<8x128xf32>
    %9 = tpu.matmul %7, %6, %cst_9 {dimension_numbers = #tpu.dot_dimension_numbers<[1], [0], [0], [1], [0, 0, 1, 1], [], []>} : vector<8x128xf32>, vector<128x128xf32>, vector<8x128xf32> -> vector<8x128xf32>
    %10 = arith.addf %8, %9 : vector<8x128xf32>
    %11 = math.tanh %10 : vector<8x128xf32>
    %c0_10 = arith.constant 0 : index
    %c0_11 = arith.constant 0 : index
    %c0_12 = arith.constant 0 : index
    %12 = vector.load %arg11[%c0_10, %c0_11, %c0_12] : memref<8x8x128xf32, #tpu.memory_space<vmem>>, vector<1x8x128xf32>
    %13 = vector.shape_cast %12 : vector<1x8x128xf32> to vector<8x128xf32>
    %14 = vector.shape_cast %11 : vector<8x128xf32> to vector<1x8x128xf32>
    tpu.vector_store %arg11[%c0_10, %c0_11, %c0_12], %14 {strides = array<i32>} : memref<8x8x128xf32, #tpu.memory_space<vmem>>, vector<1x8x128xf32>,
    %15 = vector.extract_strided_slice %5 {offsets = [8, 0], sizes = [8, 128], strides = [1, 1]} : vector<64x128xf32> to vector<8x128xf32>
    %cst_13 = arith.constant dense<0.000000e+00> : vector<8x128xf32>
    %16 = tpu.matmul %11, %6, %cst_13 {dimension_numbers = #tpu.dot_dimension_numbers<[1], [0], [0], [1], [0, 0, 1, 1], [], []>} : vector<8x128xf32>, vector<128x128xf32>, vector<8x128xf32> -> vector<8x128xf32>
    %17 = arith.addf %15, %16 : vector<8x128xf32>
    %18 = math.tanh %17 : vector<8x128xf32>
    %c1 = arith.constant 1 : index
    %c0_14 = arith.constant 0 : index
    %c0_15 = arith.constant 0 : index
    %19 = vector.load %arg11[%c1, %c0_14, %c0_15] : memref<8x8x128xf32, #tpu.memory_space<vmem>>, vector<1x8x128xf32>
    %20 = vector.shape_cast %19 : vector<1x8x128xf32> to vector<8x128xf32>
    %21 = vector.shape_cast %18 : vector<8x128xf32> to vector<1x8x128xf32>
    tpu.vector_store %arg11[%c1, %c0_14, %c0_15], %21 {strides = array<i32>} : memref<8x8x128xf32, #tpu.memory_space<vmem>>, vector<1x8x128xf32>,
    %22 = vector.extract_strided_slice %5 {offsets = [16, 0], sizes = [8, 128], strides = [1, 1]} : vector<64x128xf32> to vector<8x128xf32>
    %cst_16 = arith.constant dense<0.000000e+00> : vector<8x128xf32>
    %23 = tpu.matmul %18, %6, %cst_16 {dimension_numbers = #tpu.dot_dimension_numbers<[1], [0], [0], [1], [0, 0, 1, 1], [], []>} : vector<8x128xf32>, vector<128x128xf32>, vector<8x128xf32> -> vector<8x128xf32>
    %24 = arith.addf %22, %23 : vector<8x128xf32>
    %25 = math.tanh %24 : vector<8x128xf32>
    %c2 = arith.constant 2 : index
    %c0_17 = arith.constant 0 : index
    %c0_18 = arith.constant 0 : index
    %26 = vector.load %arg11[%c2, %c0_17, %c0_18] : memref<8x8x128xf32, #tpu.memory_space<vmem>>, vector<1x8x128xf32>
    %27 = vector.shape_cast %26 : vector<1x8x128xf32> to vector<8x128xf32>
    %28 = vector.shape_cast %25 : vector<8x128xf32> to vector<1x8x128xf32>
    tpu.vector_store %arg11[%c2, %c0_17, %c0_18], %28 {strides = array<i32>} : memref<8x8x128xf32, #tpu.memory_space<vmem>>, vector<1x8x128xf32>,
    %29 = vector.extract_strided_slice %5 {offsets = [24, 0], sizes = [8, 128], strides = [1, 1]} : vector<64x128xf32> to vector<8x128xf32>
    %cst_19 = arith.constant dense<0.000000e+00> : vector<8x128xf32>
    %30 = tpu.matmul %25, %6, %cst_19 {dimension_numbers = #tpu.dot_dimension_numbers<[1], [0], [0], [1], [0, 0, 1, 1], [], []>} : vector<8x128xf32>, vector<128x128xf32>, vector<8x128xf32> -> vector<8x128xf32>
    %31 = arith.addf %29, %30 : vector<8x128xf32>
    %32 = math.tanh %31 : vector<8x128xf32>
    %c3 = arith.constant 3 : index
    %c0_20 = arith.constant 0 : index
    %c0_21 = arith.constant 0 : index
    %33 = vector.load %arg11[%c3, %c0_20, %c0_21] : memref<8x8x128xf32, #tpu.memory_space<vmem>>, vector<1x8x128xf32>
    %34 = vector.shape_cast %33 : vector<1x8x128xf32> to vector<8x128xf32>
    %35 = vector.shape_cast %32 : vector<8x128xf32> to vector<1x8x128xf32>
    tpu.vector_store %arg11[%c3, %c0_20, %c0_21], %35 {strides = array<i32>} : memref<8x8x128xf32, #tpu.memory_space<vmem>>, vector<1x8x128xf32>,
    %36 = vector.extract_strided_slice %5 {offsets = [32, 0], sizes = [8, 128], strides = [1, 1]} : vector<64x128xf32> to vector<8x128xf32>
    %cst_22 = arith.constant dense<0.000000e+00> : vector<8x128xf32>
    %37 = tpu.matmul %32, %6, %cst_22 {dimension_numbers = #tpu.dot_dimension_numbers<[1], [0], [0], [1], [0, 0, 1, 1], [], []>} : vector<8x128xf32>, vector<128x128xf32>, vector<8x128xf32> -> vector<8x128xf32>
    %38 = arith.addf %36, %37 : vector<8x128xf32>
    %39 = math.tanh %38 : vector<8x128xf32>
    %c4 = arith.constant 4 : index
    %c0_23 = arith.constant 0 : index
    %c0_24 = arith.constant 0 : index
    %40 = vector.load %arg11[%c4, %c0_23, %c0_24] : memref<8x8x128xf32, #tpu.memory_space<vmem>>, vector<1x8x128xf32>
    %41 = vector.shape_cast %40 : vector<1x8x128xf32> to vector<8x128xf32>
    %42 = vector.shape_cast %39 : vector<8x128xf32> to vector<1x8x128xf32>
    tpu.vector_store %arg11[%c4, %c0_23, %c0_24], %42 {strides = array<i32>} : memref<8x8x128xf32, #tpu.memory_space<vmem>>, vector<1x8x128xf32>,
    %43 = vector.extract_strided_slice %5 {offsets = [40, 0], sizes = [8, 128], strides = [1, 1]} : vector<64x128xf32> to vector<8x128xf32>
    %cst_25 = arith.constant dense<0.000000e+00> : vector<8x128xf32>
    %44 = tpu.matmul %39, %6, %cst_25 {dimension_numbers = #tpu.dot_dimension_numbers<[1], [0], [0], [1], [0, 0, 1, 1], [], []>} : vector<8x128xf32>, vector<128x128xf32>, vector<8x128xf32> -> vector<8x128xf32>
    %45 = arith.addf %43, %44 : vector<8x128xf32>
    %46 = math.tanh %45 : vector<8x128xf32>
    %c5 = arith.constant 5 : index
    %c0_26 = arith.constant 0 : index
    %c0_27 = arith.constant 0 : index
    %47 = vector.load %arg11[%c5, %c0_26, %c0_27] : memref<8x8x128xf32, #tpu.memory_space<vmem>>, vector<1x8x128xf32>
    %48 = vector.shape_cast %47 : vector<1x8x128xf32> to vector<8x128xf32>
    %49 = vector.shape_cast %46 : vector<8x128xf32> to vector<1x8x128xf32>
    tpu.vector_store %arg11[%c5, %c0_26, %c0_27], %49 {strides = array<i32>} : memref<8x8x128xf32, #tpu.memory_space<vmem>>, vector<1x8x128xf32>,
    %50 = vector.extract_strided_slice %5 {offsets = [48, 0], sizes = [8, 128], strides = [1, 1]} : vector<64x128xf32> to vector<8x128xf32>
    %cst_28 = arith.constant dense<0.000000e+00> : vector<8x128xf32>
    %51 = tpu.matmul %46, %6, %cst_28 {dimension_numbers = #tpu.dot_dimension_numbers<[1], [0], [0], [1], [0, 0, 1, 1], [], []>} : vector<8x128xf32>, vector<128x128xf32>, vector<8x128xf32> -> vector<8x128xf32>
    %52 = arith.addf %50, %51 : vector<8x128xf32>
    %53 = math.tanh %52 : vector<8x128xf32>
    %c6 = arith.constant 6 : index
    %c0_29 = arith.constant 0 : index
    %c0_30 = arith.constant 0 : index
    %54 = vector.load %arg11[%c6, %c0_29, %c0_30] : memref<8x8x128xf32, #tpu.memory_space<vmem>>, vector<1x8x128xf32>
    %55 = vector.shape_cast %54 : vector<1x8x128xf32> to vector<8x128xf32>
    %56 = vector.shape_cast %53 : vector<8x128xf32> to vector<1x8x128xf32>
    tpu.vector_store %arg11[%c6, %c0_29, %c0_30], %56 {strides = array<i32>} : memref<8x8x128xf32, #tpu.memory_space<vmem>>, vector<1x8x128xf32>,
    %57 = vector.extract_strided_slice %5 {offsets = [56, 0], sizes = [8, 128], strides = [1, 1]} : vector<64x128xf32> to vector<8x128xf32>
    %cst_31 = arith.constant dense<0.000000e+00> : vector<8x128xf32>
    %58 = tpu.matmul %53, %6, %cst_31 {dimension_numbers = #tpu.dot_dimension_numbers<[1], [0], [0], [1], [0, 0, 1, 1], [], []>} : vector<8x128xf32>, vector<128x128xf32>, vector<8x128xf32> -> vector<8x128xf32>
    %59 = arith.addf %57, %58 : vector<8x128xf32>
    %60 = math.tanh %59 : vector<8x128xf32>
    %c7 = arith.constant 7 : index
    %c0_32 = arith.constant 0 : index
    %c0_33 = arith.constant 0 : index
    %61 = vector.load %arg11[%c7, %c0_32, %c0_33] : memref<8x8x128xf32, #tpu.memory_space<vmem>>, vector<1x8x128xf32>
    %62 = vector.shape_cast %61 : vector<1x8x128xf32> to vector<8x128xf32>
    %63 = vector.shape_cast %60 : vector<8x128xf32> to vector<1x8x128xf32>
    tpu.vector_store %arg11[%c7, %c0_32, %c0_33], %63 {strides = array<i32>} : memref<8x8x128xf32, #tpu.memory_space<vmem>>, vector<1x8x128xf32>,
    %c0_34 = arith.constant 0 : index
    %c0_35 = arith.constant 0 : index
    %64 = vector.load %arg10[%c0_34, %c0_35] : memref<8x128xf32, #tpu.memory_space<vmem>>, vector<8x128xf32>
    tpu.vector_store %arg10[%c0_34, %c0_35], %60 {strides = array<i32>} : memref<8x128xf32, #tpu.memory_space<vmem>>, vector<8x128xf32>,
    %c0_36 = arith.constant 0 : index
    %c0_37 = arith.constant 0 : index
    %c0_38 = arith.constant 0 : index
    %65 = vector.load %arg11[%c0_36, %c0_37, %c0_38] : memref<8x8x128xf32, #tpu.memory_space<vmem>>, vector<8x8x128xf32>
    %66 = vector.shape_cast %65 : vector<8x8x128xf32> to vector<64x128xf32>
    %c0_39 = arith.constant 0 : index
    %c0_40 = arith.constant 0 : index
    %67 = vector.load %arg5[%c0_39, %c0_40] : memref<128x128xf32, #tpu.memory_space<vmem>>, vector<128x128xf32>
    %cst_41 = arith.constant dense<0.000000e+00> : vector<64x128xf32>
    %68 = tpu.matmul %66, %67, %cst_41 {dimension_numbers = #tpu.dot_dimension_numbers<[1], [0], [0], [1], [0, 0, 1, 1], [], []>} : vector<64x128xf32>, vector<128x128xf32>, vector<64x128xf32> -> vector<64x128xf32>
    %c0_42 = arith.constant 0 : index
    %c0_43 = arith.constant 0 : index
    %69 = vector.load %arg6[%c0_42, %c0_43] : memref<1x128xf32, #tpu.memory_space<vmem>>, vector<1x128xf32>
    %70 = vector.broadcast %69 : vector<1x128xf32> to vector<64x128xf32>
    %71 = arith.addf %68, %70 : vector<64x128xf32>
    %cst_44 = arith.constant 0.000000e+00 : f32
    %72 = vector.broadcast %cst_44 : f32 to vector<64x128xf32>
    %73 = arith.maximumf %71, %72 : vector<64x128xf32>
    %c0_45 = arith.constant 0 : index
    %c0_46 = arith.constant 0 : index
    %74 = vector.load %arg7[%c0_45, %c0_46] : memref<128x128xf32, #tpu.memory_space<vmem>>, vector<128x128xf32>
    %cst_47 = arith.constant dense<0.000000e+00> : vector<64x128xf32>
    %75 = tpu.matmul %73, %74, %cst_47 {dimension_numbers = #tpu.dot_dimension_numbers<[1], [0], [0], [1], [0, 0, 1, 1], [], []>} : vector<64x128xf32>, vector<128x128xf32>, vector<64x128xf32> -> vector<64x128xf32>
    %c0_48 = arith.constant 0 : index
    %c0_49 = arith.constant 0 : index
    %76 = vector.load %arg8[%c0_48, %c0_49] : memref<1x128xf32, #tpu.memory_space<vmem>>, vector<1x128xf32>
    %77 = vector.broadcast %76 : vector<1x128xf32> to vector<64x128xf32>
    %78 = arith.addf %75, %77 : vector<64x128xf32>
    %c0_50 = arith.constant 0 : index
    %c0_51 = arith.constant 0 : index
    %79 = vector.load %arg9[%c0_50, %c0_51] : memref<64x128xf32, #tpu.memory_space<vmem>>, vector<64x128xf32>
    tpu.vector_store %arg9[%c0_50, %c0_51], %78 {strides = array<i32>} : memref<64x128xf32, #tpu.memory_space<vmem>>, vector<64x128xf32>,
    return
  }
}

</mosaic_0001>

<llo_original>
// kernel: tpu_custom_call.1
$region0: #{tpu_custom_call.1}
  #allocation0 [shape = 'u32[]', space=smem, size = 0x4, offset = 0x4, fixed_abs, tag = 'smem constant byte address 0x4 - core index']
  #allocation1 [shape = 'u32[144,128]{1,0:T(1,128)}', space=vmem, size = 0x12000, scoped, tag = 'internal scratch']
  #allocation2 [shape = 'f32[8,8,128]{2,1,0:T(8,128)}', space=vmem, size = 0x8000, scoped, tag = 'scratch operand']
  %s0 = inlined_call_operand.vmem [shape: f32[64,32], index: 0, kind: input, shape index: {}]
  %s1 = inlined_call_operand.vmem [shape: f32[8,128], index: 1, kind: input, shape index: {}]
  %s2 = inlined_call_operand.vmem [shape: f32[32,128], index: 2, kind: input, shape index: {}]
  %s3 = inlined_call_operand.hbm [shape: f32[128,128], index: 3, kind: input, shape index: {}]
  %s4 = inlined_call_operand.vmem [shape: f32[1,128], index: 4, kind: input, shape index: {}]
  %s5 = inlined_call_operand.hbm [shape: f32[128,128], index: 5, kind: input, shape index: {}]
  %s6 = inlined_call_operand.vmem [shape: f32[1,128], index: 6, kind: input, shape index: {}]
  %s7 = inlined_call_operand.hbm [shape: f32[128,128], index: 7, kind: input, shape index: {}]
  %s8 = inlined_call_operand.vmem [shape: f32[1,128], index: 8, kind: input, shape index: {}]
  %s9 = inlined_call_operand.hbm [shape: f32[64,128], index: 9, kind: output, shape index: {0}]
  %s10 = inlined_call_operand.hbm [shape: f32[8,128], index: 10, kind: output, shape index: {1}]
  %11 = xla_tuple %s9, %s10
  %s12 = sld [smem:[#allocation0]]
  $region66: #{tpu_custom_call.1} parent=0
    _
  %s14 = ssub.s32 1, %s12
  %s15 = scalar_select 0, %s14, %s12
  $region1: #{tpu_custom_call.1} parent=0
    #allocation3 [shape = 'u8[65536]{0}', space=vmem, size = 0x10000, scoped, tag = 'input window, operand 3, single buffered']
    #allocation4 [shape = 's32[1]{0}', space=sflag, size = 0x4, scoped, tag = 'scoped memory for tpu_custom_call.1']
    #allocation5 [shape = 's32[1]{0}', space=sflag, size = 0x4, scoped, tag = 'scoped memory for tpu_custom_call.1']
    #allocation6 [shape = 'u8[65536]{0}', space=vmem, size = 0x10000, scoped, tag = 'input window, operand 5, single buffered']
    #allocation7 [shape = 's32[1]{0}', space=sflag, size = 0x4, scoped, tag = 'scoped memory for tpu_custom_call.1']
    #allocation8 [shape = 'u8[65536]{0}', space=vmem, size = 0x10000, scoped, tag = 'input window, operand 7, single buffered']
    #allocation9 [shape = 'u8[32768]{0}', space=vmem, size = 0x8000, scoped, tag = 'output window, operand 0, single buffered']
    #allocation10 [shape = 'u8[4096]{0}', space=vmem, size = 0x1000, scoped, tag = 'output window, operand 1, single buffered']
    #allocation11 [shape = 's32[1]{0}', space=sflag, size = 0x4, scoped, tag = 'scoped memory for tpu_custom_call.1']
    %16 = vsyncpa [#allocation4], 0
    %17 = vsyncpa [#allocation7], 0
    %18 = vsyncpa [#allocation5], 0
    %19 = vsyncpa [#allocation11], 0
    // Predicated region
    $region2: #{tpu_custom_call.1} parent=1 // pred_check
      _
    $region3: #{tpu_custom_call.1} parent=1 // pred_check_branch
      %21 = sbr.rel (0) target = $region5
    $region4: #{tpu_custom_call.1} parent=1 // pred_region
      _
    $region5: #{tpu_custom_call.1} parent=1 // pred_fallthru
      _
    // Predicated region
    $region6: #{tpu_custom_call.1} parent=1 // pred_check
      _
    $region7: #{tpu_custom_call.1} parent=1 // pred_check_branch
      %23 = sbr.rel (0) target = $region9
    $region8: #{tpu_custom_call.1} parent=1 // pred_region
      _
    $region9: #{tpu_custom_call.1} parent=1 // pred_fallthru
      _
    // Predicated region
    $region10: #{tpu_custom_call.1} parent=1 // pred_check
      _
    $region11: #{tpu_custom_call.1} parent=1 // pred_check_branch
      %25 = sbr.rel (0) target = $region13
    $region12: #{tpu_custom_call.1} parent=1 // pred_region
      _
    $region13: #{tpu_custom_call.1} parent=1 // pred_fallthru
      _
    // Predicated region
    $region14: #{tpu_custom_call.1} parent=1 // pred_check
      _
    $region15: #{tpu_custom_call.1} parent=1 // pred_check_branch
      %27 = sbr.rel (0) target = $region17
    $region16: #{tpu_custom_call.1} parent=1 // pred_region
      %s29 = ssub.s32 2048, 2048
      %30 = vsyncadd [#allocation4], %s29
      %s31 = sshll.u32 [#allocation3], 4
      %s32 = int_to_ptr.vmem [resolvable:$true] %s31
      %37 = dma.hbm_to_vmem [thread:$0]  %s3, 2048, %s32, [#allocation4], 128, 128, 8
    $region17: #{tpu_custom_call.1} parent=1 // pred_fallthru
      _
    // Predicated region
    $region18: #{tpu_custom_call.1} parent=1 // pred_check
      _
    $region19: #{tpu_custom_call.1} parent=1 // pred_check_branch
      %39 = sbr.rel (0) target = $region21
    $region20: #{tpu_custom_call.1} parent=1 // pred_region
      _
    $region21: #{tpu_custom_call.1} parent=1 // pred_fallthru
      _
    // Predicated region
    $region22: #{tpu_custom_call.1} parent=1 // pred_check
      _
    $region23: #{tpu_custom_call.1} parent=1 // pred_check_branch
      %41 = sbr.rel (0) target = $region25
    $region24: #{tpu_custom_call.1} parent=1 // pred_region
      %s43 = ssub.s32 2048, 2048
      %44 = vsyncadd [#allocation7], %s43
      %s45 = sshll.u32 [#allocation6], 4
      %s46 = int_to_ptr.vmem [resolvable:$true] %s45
      %51 = dma.hbm_to_vmem [thread:$0]  %s5, 2048, %s46, [#allocation7], 128, 128, 8
    $region25: #{tpu_custom_call.1} parent=1 // pred_fallthru
      _
    // Predicated region
    $region26: #{tpu_custom_call.1} parent=1 // pred_check
      _
    $region27: #{tpu_custom_call.1} parent=1 // pred_check_branch
      %53 = sbr.rel (0) target = $region29
    $region28: #{tpu_custom_call.1} parent=1 // pred_region
      _
    $region29: #{tpu_custom_call.1} parent=1 // pred_fallthru
      _
    // Predicated region
    $region30: #{tpu_custom_call.1} parent=1 // pred_check
      _
    $region31: #{tpu_custom_call.1} parent=1 // pred_check_branch
      %55 = sbr.rel (0) target = $region33
    $region32: #{tpu_custom_call.1} parent=1 // pred_region
      %s57 = ssub.s32 2048, 2048
      %58 = vsyncadd [#allocation7], %s57
      %s59 = sshll.u32 [#allocation8], 4
      %s60 = int_to_ptr.vmem [resolvable:$true] %s59
      %65 = dma.hbm_to_vmem [thread:$0]  %s7, 2048, %s60, [#allocation7], 128, 128, 8
    $region33: #{tpu_custom_call.1} parent=1 // pred_fallthru
      _
    // Predicated region
    $region34: #{tpu_custom_call.1} parent=1 // pred_check
      _
    $region35: #{tpu_custom_call.1} parent=1 // pred_check_branch
      %67 = sbr.rel (0) target = $region37
    $region36: #{tpu_custom_call.1} parent=1 // pred_region
      _
    $region37: #{tpu_custom_call.1} parent=1 // pred_fallthru
      _
    // Predicated region
    $region38: #{tpu_custom_call.1} parent=1 // pred_check
      _
    $region39: #{tpu_custom_call.1} parent=1 // pred_check_branch
      %69 = sbr.rel (0) target = $region41
    $region40: #{tpu_custom_call.1} parent=1 // pred_region
      %70 = dma.done [#allocation4], 2048
    $region41: #{tpu_custom_call.1} parent=1 // pred_fallthru
      _
    // Predicated region
    $region42: #{tpu_custom_call.1} parent=1 // pred_check
      _
    $region43: #{tpu_custom_call.1} parent=1 // pred_check_branch
      %72 = sbr.rel (0) target = $region45
    $region44: #{tpu_custom_call.1} parent=1 // pred_region
      %73 = dma.done [#allocation7], 2048
    $region45: #{tpu_custom_call.1} parent=1 // pred_fallthru
      _
    // Predicated region
    $region46: #{tpu_custom_call.1} parent=1 // pred_check
      _
    $region47: #{tpu_custom_call.1} parent=1 // pred_check_branch
      %75 = sbr.rel (0) target = $region49
    $region48: #{tpu_custom_call.1} parent=1 // pred_region
      %76 = dma.done [#allocation7], 2048
    $region49: #{tpu_custom_call.1} parent=1 // pred_fallthru
      _
    %v77 = vld [vmem:[%s0] sm:$0xff]
    %v78 = vld [vmem:[%s0 + $0x8] sm:$0xff]
    %v79 = vld [vmem:[%s0 + $0x10] sm:$0xff]
    %v80 = vld [vmem:[%s0 + $0x18] sm:$0xff]
    %v81 = vld [vmem:[%s0 + $0x20] sm:$0xff]
    %v82 = vld [vmem:[%s0 + $0x28] sm:$0xff]
    %v83 = vld [vmem:[%s0 + $0x30] sm:$0xff]
    %v84 = vld [vmem:[%s0 + $0x38] sm:$0xff]
    %v85 = vld [vmem:[%s2] sm:$0xff]
    %v86 = vld [vmem:[%s2 + $0x8] sm:$0xff]
    %v87 = vld [vmem:[%s2 + $0x10] sm:$0xff]
    %v88 = vld [vmem:[%s2 + $0x18] sm:$0xff]
    %v89 = vld [vmem:[%s4] sm:$0x1]
    %v91 = vlaneseq
    %v92 = vshrl.u32 %v91, 7
    %v93 = vsub.s32 0, %v92
    %v94 = vrot.slane %v89, %v93
    %vm96 = vcmask 261120
    %v98 = vsel %vm96, %v77, 0
    %v101 = vsel %vm96, %v78, 0
    %v104 = vsel %vm96, %v79, 0
    %v107 = vsel %vm96, %v80, 0
    %v110 = vsel %vm96, %v81, 0
    %v113 = vsel %vm96, %v82, 0
    %v116 = vsel %vm96, %v83, 0
    %v119 = vsel %vm96, %v84, 0
    %121 = vmatprep.subr.mxu0 0.0
    %122 = vmatpush1.msra.mxu0 0.0
    %123 = vmatprep.subr.mxu0 0.0
    %124 = vmatpush1.msra.mxu0 0.0
    %125 = vmatprep.subr.mxu0 0.0
    %126 = vmatpush1.msra.mxu0 0.0
    %127 = vmatprep.subr.mxu0 0.0
    %128 = vmatpush1.msra.mxu0 0.0
    %129 = vmatprep.subr.mxu0 0.0
    %130 = vmatpush1.msra.mxu0 0.0
    %131 = vmatprep.subr.mxu0 0.0
    %132 = vmatpush1.msra.mxu0 0.0
    %133 = vmatprep.subr.mxu0 0.0
    %134 = vmatpush1.msra.mxu0 0.0
    %135 = vmatprep.subr.mxu0 0.0
    %136 = vmatpush1.msra.mxu0 0.0
    %137 = vmatprep.subr.mxu0 0.0
    %138 = vmatpush1.msra.mxu0 0.0
    %139 = vmatprep.subr.mxu0 0.0
    %140 = vmatpush1.msra.mxu0 0.0
    %141 = vmatprep.subr.mxu0 0.0
    %142 = vmatpush1.msra.mxu0 0.0
    %143 = vmatprep.subr.mxu0 0.0
    %144 = vmatpush1.msra.mxu0 0.0
    %145 = vmatprep.subr.mxu0 0.0
    %146 = vmatpush1.msra.mxu0 %v88
    %147 = vmatprep.subr.mxu0 0.0
    %148 = vmatpush1.msra.mxu0 %v87
    %149 = vmatprep.subr.mxu0 0.0
    %150 = vmatpush1.msra.mxu0 %v86
    %151 = vmatprep.subr.mxu0 0.0
    %152 = vmatpush1.msra.mxu0 %v85
    %153 = vmatprep.subr.mxu0 0.0
    %154 = vmatpush2.msra.mxu0 0.0
    %155 = vmatprep.subr.mxu0 0.0
    %156 = vmatpush2.msra.mxu0 0.0
    %157 = vmatprep.subr.mxu0 0.0
    %158 = vmatpush2.msra.mxu0 0.0
    %159 = vmatprep.subr.mxu0 0.0
    %160 = vmatpush2.msra.mxu0 0.0
    %161 = vmatprep.subr.mxu0 0.0
    %162 = vmatpush2.msra.mxu0 0.0
    %163 = vmatprep.subr.mxu0 0.0
    %164 = vmatpush2.msra.mxu0 0.0
    %165 = vmatprep.subr.mxu0 0.0
    %166 = vmatpush2.msra.mxu0 0.0
    %167 = vmatprep.subr.mxu0 0.0
    %168 = vmatpush2.msra.mxu0 0.0
    %169 = vmatprep.subr.mxu0 0.0
    %170 = vmatpush2.msra.mxu0 0.0
    %171 = vmatprep.subr.mxu0 0.0
    %172 = vmatpush2.msra.mxu0 0.0
    %173 = vmatprep.subr.mxu0 0.0
    %174 = vmatpush2.msra.mxu0 0.0
    %175 = vmatprep.subr.mxu0 0.0
    %176 = vmatpush2.msra.mxu0 0.0
    %177 = vmatprep.subr.mxu0 0.0
    %178 = vmatpush2.msra.mxu0 0.0
    %179 = vmatprep.subr.mxu0 0.0
    %180 = vmatpush2.msra.mxu0 0.0
    %181 = vmatprep.subr.mxu0 0.0
    %182 = vmatpush2.msra.mxu0 0.0
    %183 = vmatprep.subr.mxu0 0.0
    %184 = vmatpush2.msra.mxu0 0.0
    %185 = vmatprep.mubr.f32.mxu0 0.0
    %186 = vmatmul.mubr.f32.gmra.mxu0 %v98
    %v187 = vpop.f32.mrf.mxu0
    %v188 = vadd.f32 %v94, %v187
    %v189 = vpop.f32.mrf.mxu0
    %190 = vmatprep.mubr.f32.mxu0 0.0
    %191 = vmatmul.mubr.f32.gmra.mxu0 %v101
    %v192 = vpop.f32.mrf.mxu0
    %v193 = vadd.f32 %v94, %v192
    %v194 = vpop.f32.mrf.mxu0
    %195 = vmatprep.mubr.f32.mxu0 0.0
    %196 = vmatmul.mubr.f32.gmra.mxu0 %v104
    %v197 = vpop.f32.mrf.mxu0
    %v198 = vadd.f32 %v94, %v197
    %v199 = vpop.f32.mrf.mxu0
    %200 = vmatprep.mubr.f32.mxu0 0.0
    %201 = vmatmul.mubr.f32.gmra.mxu0 %v107
    %v202 = vpop.f32.mrf.mxu0
    %v203 = vadd.f32 %v94, %v202
    %v204 = vpop.f32.mrf.mxu0
    %205 = vmatprep.mubr.f32.mxu0 0.0
    %206 = vmatmul.mubr.f32.gmra.mxu0 %v110
    %v207 = vpop.f32.mrf.mxu0
    %v208 = vadd.f32 %v94, %v207
    %v209 = vpop.f32.mrf.mxu0
    %210 = vmatprep.mubr.f32.mxu0 0.0
    %211 = vmatmul.mubr.f32.gmra.mxu0 %v113
    %v212 = vpop.f32.mrf.mxu0
    %v213 = vadd.f32 %v94, %v212
    %v214 = vpop.f32.mrf.mxu0
    %215 = vmatprep.mubr.f32.mxu0 0.0
    %216 = vmatmul.mubr.f32.gmra.mxu0 %v116
    %v217 = vpop.f32.mrf.mxu0
    %v218 = vadd.f32 %v94, %v217
    %v219 = vpop.f32.mrf.mxu0
    %220 = vmatprep.mubr.f32.mxu0 0.0
    %221 = vmatmul.mubr.f32.gmra.mxu0 %v119
    %v222 = vpop.f32.mrf.mxu0
    %v223 = vadd.f32 %v94, %v222
    %v224 = vpop.f32.mrf.mxu0
    %225 = vdwg.mxu0
    %v226 = vld [vmem:[#allocation3] sm:$0xff]
    %v227 = vld [vmem:[#allocation3 + $0x8] sm:$0xff]
    %v228 = vld [vmem:[#allocation3 + $0x10] sm:$0xff]
    %v229 = vld [vmem:[#allocation3 + $0x18] sm:$0xff]
    %v230 = vld [vmem:[#allocation3 + $0x20] sm:$0xff]
    %v231 = vld [vmem:[#allocation3 + $0x28] sm:$0xff]
    %v232 = vld [vmem:[#allocation3 + $0x30] sm:$0xff]
    %v233 = vld [vmem:[#allocation3 + $0x38] sm:$0xff]
    %v234 = vld [vmem:[#allocation3 + $0x40] sm:$0xff]
    %v235 = vld [vmem:[#allocation3 + $0x48] sm:$0xff]
    %v236 = vld [vmem:[#allocation3 + $0x50] sm:$0xff]
    %v237 = vld [vmem:[#allocation3 + $0x58] sm:$0xff]
    %v238 = vld [vmem:[#allocation3 + $0x60] sm:$0xff]
    %v239 = vld [vmem:[#allocation3 + $0x68] sm:$0xff]
    %v240 = vld [vmem:[#allocation3 + $0x70] sm:$0xff]
    %v241 = vld [vmem:[#allocation3 + $0x78] sm:$0xff]
    %v242 = vld [vmem:[%s1] sm:$0xff]
    %243 = vmatprep.subr.mxu0 0.0
    %244 = vmatpush1.msra.mxu0 %v241
    %245 = vmatprep.subr.mxu0 0.0
    %246 = vmatpush1.msra.mxu0 %v240
    %247 = vmatprep.subr.mxu0 0.0
    %248 = vmatpush1.msra.mxu0 %v239
    %249 = vmatprep.subr.mxu0 0.0
    %250 = vmatpush1.msra.mxu0 %v238
    %251 = vmatprep.subr.mxu0 0.0
    %252 = vmatpush1.msra.mxu0 %v237
    %253 = vmatprep.subr.mxu0 0.0
    %254 = vmatpush1.msra.mxu0 %v236
    %255 = vmatprep.subr.mxu0 0.0
    %256 = vmatpush1.msra.mxu0 %v235
    %257 = vmatprep.subr.mxu0 0.0
    %258 = vmatpush1.msra.mxu0 %v234
    %259 = vmatprep.subr.mxu0 0.0
    %260 = vmatpush1.msra.mxu0 %v233
    %261 = vmatprep.subr.mxu0 0.0
    %262 = vmatpush1.msra.mxu0 %v232
    %263 = vmatprep.subr.mxu0 0.0
    %264 = vmatpush1.msra.mxu0 %v231
    %265 = vmatprep.subr.mxu0 0.0
    %266 = vmatpush1.msra.mxu0 %v230
    %267 = vmatprep.subr.mxu0 0.0
    %268 = vmatpush1.msra.mxu0 %v229
    %269 = vmatprep.subr.mxu0 0.0
    %270 = vmatpush1.msra.mxu0 %v228
    %271 = vmatprep.subr.mxu0 0.0
    %272 = vmatpush1.msra.mxu0 %v227
    %273 = vmatprep.subr.mxu0 0.0
    %274 = vmatpush1.msra.mxu0 %v226
    %275 = vmatprep.subr.mxu0 0.0
    %276 = vmatpush2.msra.mxu0 0.0
    %277 = vmatprep.subr.mxu0 0.0
    %278 = vmatpush2.msra.mxu0 0.0
    %279 = vmatprep.subr.mxu0 0.0
    %280 = vmatpush2.msra.mxu0 0.0
    %281 = vmatprep.subr.mxu0 0.0
    %282 = vmatpush2.msra.mxu0 0.0
    %283 = vmatprep.subr.mxu0 0.0
    %284 = vmatpush2.msra.mxu0 0.0
    %285 = vmatprep.subr.mxu0 0.0
    %286 = vmatpush2.msra.mxu0 0.0
    %287 = vmatprep.subr.mxu0 0.0
    %288 = vmatpush2.msra.mxu0 0.0
    %289 = vmatprep.subr.mxu0 0.0
    %290 = vmatpush2.msra.mxu0 0.0
    %291 = vmatprep.subr.mxu0 0.0
    %292 = vmatpush2.msra.mxu0 0.0
    %293 = vmatprep.subr.mxu0 0.0
    %294 = vmatpush2.msra.mxu0 0.0
    %295 = vmatprep.subr.mxu0 0.0
    %296 = vmatpush2.msra.mxu0 0.0
    %297 = vmatprep.subr.mxu0 0.0
    %298 = vmatpush2.msra.mxu0 0.0
    %299 = vmatprep.subr.mxu0 0.0
    %300 = vmatpush2.msra.mxu0 0.0
    %301 = vmatprep.subr.mxu0 0.0
    %302 = vmatpush2.msra.mxu0 0.0
    %303 = vmatprep.subr.mxu0 0.0
    %304 = vmatpush2.msra.mxu0 0.0
    %305 = vmatprep.subr.mxu0 0.0
    %306 = vmatpush2.msra.mxu0 0.0
    %307 = vmatprep.mubr.f32.mxu0 0.0
    %308 = vmatmul.mubr.f32.gmra.mxu0 %v242
    %v309 = vpop.f32.mrf.mxu0
    %v310 = vadd.f32 0.0, %v309
    %v311 = vpop.f32.mrf.mxu0
    %312 = vdwg.mxu0
    %v313 = vadd.f32 %v188, %v310
    %v314 = vtanh.pop %v313
    %315 = vst [vmem:[#allocation2] sm:$0xff] %v314
    %316 = vmatprep.subr.mxu0 0.0
    %317 = vmatpush1.msra.mxu0 %v241
    %318 = vmatprep.subr.mxu0 0.0
    %319 = vmatpush1.msra.mxu0 %v240
    %320 = vmatprep.subr.mxu0 0.0
    %321 = vmatpush1.msra.mxu0 %v239
    %322 = vmatprep.subr.mxu0 0.0
    %323 = vmatpush1.msra.mxu0 %v238
    %324 = vmatprep.subr.mxu0 0.0
    %325 = vmatpush1.msra.mxu0 %v237
    %326 = vmatprep.subr.mxu0 0.0
    %327 = vmatpush1.msra.mxu0 %v236
    %328 = vmatprep.subr.mxu0 0.0
    %329 = vmatpush1.msra.mxu0 %v235
    %330 = vmatprep.subr.mxu0 0.0
    %331 = vmatpush1.msra.mxu0 %v234
    %332 = vmatprep.subr.mxu0 0.0
    %333 = vmatpush1.msra.mxu0 %v233
    %334 = vmatprep.subr.mxu0 0.0
    %335 = vmatpush1.msra.mxu0 %v232
    %336 = vmatprep.subr.mxu0 0.0
    %337 = vmatpush1.msra.mxu0 %v231
    %338 = vmatprep.subr.mxu0 0.0
    %339 = vmatpush1.msra.mxu0 %v230
    %340 = vmatprep.subr.mxu0 0.0
    %341 = vmatpush1.msra.mxu0 %v229
    %342 = vmatprep.subr.mxu0 0.0
    %343 = vmatpush1.msra.mxu0 %v228
    %344 = vmatprep.subr.mxu0 0.0
    %345 = vmatpush1.msra.mxu0 %v227
    %346 = vmatprep.subr.mxu0 0.0
    %347 = vmatpush1.msra.mxu0 %v226
    %348 = vmatprep.subr.mxu0 0.0
    %349 = vmatpush2.msra.mxu0 0.0
    %350 = vmatprep.subr.mxu0 0.0
    %351 = vmatpush2.msra.mxu0 0.0
    %352 = vmatprep.subr.mxu0 0.0
    %353 = vmatpush2.msra.mxu0 0.0
    %354 = vmatprep.subr.mxu0 0.0
    %355 = vmatpush2.msra.mxu0 0.0
    %356 = vmatprep.subr.mxu0 0.0
    %357 = vmatpush2.msra.mxu0 0.0
    %358 = vmatprep.subr.mxu0 0.0
    %359 = vmatpush2.msra.mxu0 0.0
    %360 = vmatprep.subr.mxu0 0.0
    %361 = vmatpush2.msra.mxu0 0.0
    %362 = vmatprep.subr.mxu0 0.0
    %363 = vmatpush2.msra.mxu0 0.0
    %364 = vmatprep.subr.mxu0 0.0
    %365 = vmatpush2.msra.mxu0 0.0
    %366 = vmatprep.subr.mxu0 0.0
    %367 = vmatpush2.msra.mxu0 0.0
    %368 = vmatprep.subr.mxu0 0.0
    %369 = vmatpush2.msra.mxu0 0.0
    %370 = vmatprep.subr.mxu0 0.0
    %371 = vmatpush2.msra.mxu0 0.0
    %372 = vmatprep.subr.mxu0 0.0
    %373 = vmatpush2.msra.mxu0 0.0
    %374 = vmatprep.subr.mxu0 0.0
    %375 = vmatpush2.msra.mxu0 0.0
    %376 = vmatprep.subr.mxu0 0.0
    %377 = vmatpush2.msra.mxu0 0.0
    %378 = vmatprep.subr.mxu0 0.0
    %379 = vmatpush2.msra.mxu0 0.0
    %380 = vmatprep.mubr.f32.mxu0 0.0
    %381 = vmatmul.mubr.f32.gmra.mxu0 %v314
    %v382 = vpop.f32.mrf.mxu0
    %v383 = vadd.f32 0.0, %v382
    %v384 = vpop.f32.mrf.mxu0
    %385 = vdwg.mxu0
    %v386 = vadd.f32 %v193, %v383
    %v387 = vtanh.pop %v386
    %s388 = scalar_lea.vmem [#allocation2], 8
    %389 = vst [vmem:[%s388] sm:$0xff] %v387
    %390 = vmatprep.subr.mxu0 0.0
    %391 = vmatpush1.msra.mxu0 %v241
    %392 = vmatprep.subr.mxu0 0.0
    %393 = vmatpush1.msra.mxu0 %v240
    %394 = vmatprep.subr.mxu0 0.0
    %395 = vmatpush1.msra.mxu0 %v239
    %396 = vmatprep.subr.mxu0 0.0
    %397 = vmatpush1.msra.mxu0 %v238
    %398 = vmatprep.subr.mxu0 0.0
    %399 = vmatpush1.msra.mxu0 %v237
    %400 = vmatprep.subr.mxu0 0.0
    %401 = vmatpush1.msra.mxu0 %v236
    %402 = vmatprep.subr.mxu0 0.0
    %403 = vmatpush1.msra.mxu0 %v235
    %404 = vmatprep.subr.mxu0 0.0
    %405 = vmatpush1.msra.mxu0 %v234
    %406 = vmatprep.subr.mxu0 0.0
    %407 = vmatpush1.msra.mxu0 %v233
    %408 = vmatprep.subr.mxu0 0.0
    %409 = vmatpush1.msra.mxu0 %v232
    %410 = vmatprep.subr.mxu0 0.0
    %411 = vmatpush1.msra.mxu0 %v231
    %412 = vmatprep.subr.mxu0 0.0
    %413 = vmatpush1.msra.mxu0 %v230
    %414 = vmatprep.subr.mxu0 0.0
    %415 = vmatpush1.msra.mxu0 %v229
    %416 = vmatprep.subr.mxu0 0.0
    %417 = vmatpush1.msra.mxu0 %v228
    %418 = vmatprep.subr.mxu0 0.0
    %419 = vmatpush1.msra.mxu0 %v227
    %420 = vmatprep.subr.mxu0 0.0
    %421 = vmatpush1.msra.mxu0 %v226
    %422 = vmatprep.subr.mxu0 0.0
    %423 = vmatpush2.msra.mxu0 0.0
    %424 = vmatprep.subr.mxu0 0.0
    %425 = vmatpush2.msra.mxu0 0.0
    %426 = vmatprep.subr.mxu0 0.0
    %427 = vmatpush2.msra.mxu0 0.0
    %428 = vmatprep.subr.mxu0 0.0
    %429 = vmatpush2.msra.mxu0 0.0
    %430 = vmatprep.subr.mxu0 0.0
    %431 = vmatpush2.msra.mxu0 0.0
    %432 = vmatprep.subr.mxu0 0.0
    %433 = vmatpush2.msra.mxu0 0.0
    %434 = vmatprep.subr.mxu0 0.0
    %435 = vmatpush2.msra.mxu0 0.0
    %436 = vmatprep.subr.mxu0 0.0
    %437 = vmatpush2.msra.mxu0 0.0
    %438 = vmatprep.subr.mxu0 0.0
    %439 = vmatpush2.msra.mxu0 0.0
    %440 = vmatprep.subr.mxu0 0.0
    %441 = vmatpush2.msra.mxu0 0.0
    %442 = vmatprep.subr.mxu0 0.0
    %443 = vmatpush2.msra.mxu0 0.0
    %444 = vmatprep.subr.mxu0 0.0
    %445 = vmatpush2.msra.mxu0 0.0
    %446 = vmatprep.subr.mxu0 0.0
    %447 = vmatpush2.msra.mxu0 0.0
    %448 = vmatprep.subr.mxu0 0.0
    %449 = vmatpush2.msra.mxu0 0.0
    %450 = vmatprep.subr.mxu0 0.0
    %451 = vmatpush2.msra.mxu0 0.0
    %452 = vmatprep.subr.mxu0 0.0
    %453 = vmatpush2.msra.mxu0 0.0
    %454 = vmatprep.mubr.f32.mxu0 0.0
    %455 = vmatmul.mubr.f32.gmra.mxu0 %v387
    %v456 = vpop.f32.mrf.mxu0
    %v457 = vadd.f32 0.0, %v456
    %v458 = vpop.f32.mrf.mxu0
    %459 = vdwg.mxu0
    %v460 = vadd.f32 %v198, %v457
    %v461 = vtanh.pop %v460
    %s462 = scalar_lea.vmem [#allocation2], 16
    %463 = vst [vmem:[%s462] sm:$0xff] %v461
    %464 = vmatprep.subr.mxu0 0.0
    %465 = vmatpush1.msra.mxu0 %v241
    %466 = vmatprep.subr.mxu0 0.0
    %467 = vmatpush1.msra.mxu0 %v240
    %468 = vmatprep.subr.mxu0 0.0
    %469 = vmatpush1.msra.mxu0 %v239
    %470 = vmatprep.subr.mxu0 0.0
    %471 = vmatpush1.msra.mxu0 %v238
    %472 = vmatprep.subr.mxu0 0.0
    %473 = vmatpush1.msra.mxu0 %v237
    %474 = vmatprep.subr.mxu0 0.0
    %475 = vmatpush1.msra.mxu0 %v236
    %476 = vmatprep.subr.mxu0 0.0
    %477 = vmatpush1.msra.mxu0 %v235
    %478 = vmatprep.subr.mxu0 0.0
    %479 = vmatpush1.msra.mxu0 %v234
    %480 = vmatprep.subr.mxu0 0.0
    %481 = vmatpush1.msra.mxu0 %v233
    %482 = vmatprep.subr.mxu0 0.0
    %483 = vmatpush1.msra.mxu0 %v232
    %484 = vmatprep.subr.mxu0 0.0
    %485 = vmatpush1.msra.mxu0 %v231
    %486 = vmatprep.subr.mxu0 0.0
    %487 = vmatpush1.msra.mxu0 %v230
    %488 = vmatprep.subr.mxu0 0.0
    %489 = vmatpush1.msra.mxu0 %v229
    %490 = vmatprep.subr.mxu0 0.0
    %491 = vmatpush1.msra.mxu0 %v228
    %492 = vmatprep.subr.mxu0 0.0
    %493 = vmatpush1.msra.mxu0 %v227
    %494 = vmatprep.subr.mxu0 0.0
    %495 = vmatpush1.msra.mxu0 %v226
    %496 = vmatprep.subr.mxu0 0.0
    %497 = vmatpush2.msra.mxu0 0.0
    %498 = vmatprep.subr.mxu0 0.0
    %499 = vmatpush2.msra.mxu0 0.0
    %500 = vmatprep.subr.mxu0 0.0
    %501 = vmatpush2.msra.mxu0 0.0
    %502 = vmatprep.subr.mxu0 0.0
    %503 = vmatpush2.msra.mxu0 0.0
    %504 = vmatprep.subr.mxu0 0.0
    %505 = vmatpush2.msra.mxu0 0.0
    %506 = vmatprep.subr.mxu0 0.0
    %507 = vmatpush2.msra.mxu0 0.0
    %508 = vmatprep.subr.mxu0 0.0
    %509 = vmatpush2.msra.mxu0 0.0
    %510 = vmatprep.subr.mxu0 0.0
    %511 = vmatpush2.msra.mxu0 0.0
    %512 = vmatprep.subr.mxu0 0.0
    %513 = vmatpush2.msra.mxu0 0.0
    %514 = vmatprep.subr.mxu0 0.0
    %515 = vmatpush2.msra.mxu0 0.0
    %516 = vmatprep.subr.mxu0 0.0
    %517 = vmatpush2.msra.mxu0 0.0
    %518 = vmatprep.subr.mxu0 0.0
    %519 = vmatpush2.msra.mxu0 0.0
    %520 = vmatprep.subr.mxu0 0.0
    %521 = vmatpush2.msra.mxu0 0.0
    %522 = vmatprep.subr.mxu0 0.0
    %523 = vmatpush2.msra.mxu0 0.0
    %524 = vmatprep.subr.mxu0 0.0
    %525 = vmatpush2.msra.mxu0 0.0
    %526 = vmatprep.subr.mxu0 0.0
    %527 = vmatpush2.msra.mxu0 0.0
    %528 = vmatprep.mubr.f32.mxu0 0.0
    %529 = vmatmul.mubr.f32.gmra.mxu0 %v461
    %v530 = vpop.f32.mrf.mxu0
    %v531 = vadd.f32 0.0, %v530
    %v532 = vpop.f32.mrf.mxu0
    %533 = vdwg.mxu0
    %v534 = vadd.f32 %v203, %v531
    %v535 = vtanh.pop %v534
    %s536 = scalar_lea.vmem [#allocation2], 24
    %537 = vst [vmem:[%s536] sm:$0xff] %v535
    %538 = vmatprep.subr.mxu0 0.0
    %539 = vmatpush1.msra.mxu0 %v241
    %540 = vmatprep.subr.mxu0 0.0
    %541 = vmatpush1.msra.mxu0 %v240
    %542 = vmatprep.subr.mxu0 0.0
    %543 = vmatpush1.msra.mxu0 %v239
    %544 = vmatprep.subr.mxu0 0.0
    %545 = vmatpush1.msra.mxu0 %v238
    %546 = vmatprep.subr.mxu0 0.0
    %547 = vmatpush1.msra.mxu0 %v237
    %548 = vmatprep.subr.mxu0 0.0
    %549 = vmatpush1.msra.mxu0 %v236
    %550 = vmatprep.subr.mxu0 0.0
    %551 = vmatpush1.msra.mxu0 %v235
    %552 = vmatprep.subr.mxu0 0.0
    %553 = vmatpush1.msra.mxu0 %v234
    %554 = vmatprep.subr.mxu0 0.0
    %555 = vmatpush1.msra.mxu0 %v233
    %556 = vmatprep.subr.mxu0 0.0
    %557 = vmatpush1.msra.mxu0 %v232
    %558 = vmatprep.subr.mxu0 0.0
    %559 = vmatpush1.msra.mxu0 %v231
    %560 = vmatprep.subr.mxu0 0.0
    %561 = vmatpush1.msra.mxu0 %v230
    %562 = vmatprep.subr.mxu0 0.0
    %563 = vmatpush1.msra.mxu0 %v229
    %564 = vmatprep.subr.mxu0 0.0
    %565 = vmatpush1.msra.mxu0 %v228
    %566 = vmatprep.subr.mxu0 0.0
    %567 = vmatpush1.msra.mxu0 %v227
    %568 = vmatprep.subr.mxu0 0.0
    %569 = vmatpush1.msra.mxu0 %v226
    %570 = vmatprep.subr.mxu0 0.0
    %571 = vmatpush2.msra.mxu0 0.0
    %572 = vmatprep.subr.mxu0 0.0
    %573 = vmatpush2.msra.mxu0 0.0
    %574 = vmatprep.subr.mxu0 0.0
    %575 = vmatpush2.msra.mxu0 0.0
    %576 = vmatprep.subr.mxu0 0.0
    %577 = vmatpush2.msra.mxu0 0.0
    %578 = vmatprep.subr.mxu0 0.0
    %579 = vmatpush2.msra.mxu0 0.0
    %580 = vmatprep.subr.mxu0 0.0
    %581 = vmatpush2.msra.mxu0 0.0
    %582 = vmatprep.subr.mxu0 0.0
    %583 = vmatpush2.msra.mxu0 0.0
    %584 = vmatprep.subr.mxu0 0.0
    %585 = vmatpush2.msra.mxu0 0.0
    %586 = vmatprep.subr.mxu0 0.0
    %587 = vmatpush2.msra.mxu0 0.0
    %588 = vmatprep.subr.mxu0 0.0
    %589 = vmatpush2.msra.mxu0 0.0
    %590 = vmatprep.subr.mxu0 0.0
    %591 = vmatpush2.msra.mxu0 0.0
    %592 = vmatprep.subr.mxu0 0.0
    %593 = vmatpush2.msra.mxu0 0.0
    %594 = vmatprep.subr.mxu0 0.0
    %595 = vmatpush2.msra.mxu0 0.0
    %596 = vmatprep.subr.mxu0 0.0
    %597 = vmatpush2.msra.mxu0 0.0
    %598 = vmatprep.subr.mxu0 0.0
    %599 = vmatpush2.msra.mxu0 0.0
    %600 = vmatprep.subr.mxu0 0.0
    %601 = vmatpush2.msra.mxu0 0.0
    %602 = vmatprep.mubr.f32.mxu0 0.0
    %603 = vmatmul.mubr.f32.gmra.mxu0 %v535
    %v604 = vpop.f32.mrf.mxu0
    %v605 = vadd.f32 0.0, %v604
    %v606 = vpop.f32.mrf.mxu0
    %607 = vdwg.mxu0
    %v608 = vadd.f32 %v208, %v605
    %v609 = vtanh.pop %v608
    %s610 = scalar_lea.vmem [#allocation2], 32
    %611 = vst [vmem:[%s610] sm:$0xff] %v609
    %612 = vmatprep.subr.mxu0 0.0
    %613 = vmatpush1.msra.mxu0 %v241
    %614 = vmatprep.subr.mxu0 0.0
    %615 = vmatpush1.msra.mxu0 %v240
    %616 = vmatprep.subr.mxu0 0.0
    %617 = vmatpush1.msra.mxu0 %v239
    %618 = vmatprep.subr.mxu0 0.0
    %619 = vmatpush1.msra.mxu0 %v238
    %620 = vmatprep.subr.mxu0 0.0
    %621 = vmatpush1.msra.mxu0 %v237
    %622 = vmatprep.subr.mxu0 0.0
    %623 = vmatpush1.msra.mxu0 %v236
    %624 = vmatprep.subr.mxu0 0.0
    %625 = vmatpush1.msra.mxu0 %v235
    %626 = vmatprep.subr.mxu0 0.0
    %627 = vmatpush1.msra.mxu0 %v234
    %628 = vmatprep.subr.mxu0 0.0
    %629 = vmatpush1.msra.mxu0 %v233
    %630 = vmatprep.subr.mxu0 0.0
    %631 = vmatpush1.msra.mxu0 %v232
    %632 = vmatprep.subr.mxu0 0.0
    %633 = vmatpush1.msra.mxu0 %v231
    %634 = vmatprep.subr.mxu0 0.0
    %635 = vmatpush1.msra.mxu0 %v230
    %636 = vmatprep.subr.mxu0 0.0
    %637 = vmatpush1.msra.mxu0 %v229
    %638 = vmatprep.subr.mxu0 0.0
    %639 = vmatpush1.msra.mxu0 %v228
    %640 = vmatprep.subr.mxu0 0.0
    %641 = vmatpush1.msra.mxu0 %v227
    %642 = vmatprep.subr.mxu0 0.0
    %643 = vmatpush1.msra.mxu0 %v226
    %644 = vmatprep.subr.mxu0 0.0
    %645 = vmatpush2.msra.mxu0 0.0
    %646 = vmatprep.subr.mxu0 0.0
    %647 = vmatpush2.msra.mxu0 0.0
    %648 = vmatprep.subr.mxu0 0.0
    %649 = vmatpush2.msra.mxu0 0.0
    %650 = vmatprep.subr.mxu0 0.0
    %651 = vmatpush2.msra.mxu0 0.0
    %652 = vmatprep.subr.mxu0 0.0
    %653 = vmatpush2.msra.mxu0 0.0
    %654 = vmatprep.subr.mxu0 0.0
    %655 = vmatpush2.msra.mxu0 0.0
    %656 = vmatprep.subr.mxu0 0.0
    %657 = vmatpush2.msra.mxu0 0.0
    %658 = vmatprep.subr.mxu0 0.0
    %659 = vmatpush2.msra.mxu0 0.0
    %660 = vmatprep.subr.mxu0 0.0
    %661 = vmatpush2.msra.mxu0 0.0
    %662 = vmatprep.subr.mxu0 0.0
    %663 = vmatpush2.msra.mxu0 0.0
    %664 = vmatprep.subr.mxu0 0.0
    %665 = vmatpush2.msra.mxu0 0.0
    %666 = vmatprep.subr.mxu0 0.0
    %667 = vmatpush2.msra.mxu0 0.0
    %668 = vmatprep.subr.mxu0 0.0
    %669 = vmatpush2.msra.mxu0 0.0
    %670 = vmatprep.subr.mxu0 0.0
    %671 = vmatpush2.msra.mxu0 0.0
    %672 = vmatprep.subr.mxu0 0.0
    %673 = vmatpush2.msra.mxu0 0.0
    %674 = vmatprep.subr.mxu0 0.0
    %675 = vmatpush2.msra.mxu0 0.0
    %676 = vmatprep.mubr.f32.mxu0 0.0
    %677 = vmatmul.mubr.f32.gmra.mxu0 %v609
    %v678 = vpop.f32.mrf.mxu0
    %v679 = vadd.f32 0.0, %v678
    %v680 = vpop.f32.mrf.mxu0
    %681 = vdwg.mxu0
    %v682 = vadd.f32 %v213, %v679
    %v683 = vtanh.pop %v682
    %s684 = scalar_lea.vmem [#allocation2], 40
    %685 = vst [vmem:[%s684] sm:$0xff] %v683
    %686 = vmatprep.subr.mxu0 0.0
    %687 = vmatpush1.msra.mxu0 %v241
    %688 = vmatprep.subr.mxu0 0.0
    %689 = vmatpush1.msra.mxu0 %v240
    %690 = vmatprep.subr.mxu0 0.0
    %691 = vmatpush1.msra.mxu0 %v239
    %692 = vmatprep.subr.mxu0 0.0
    %693 = vmatpush1.msra.mxu0 %v238
    %694 = vmatprep.subr.mxu0 0.0
    %695 = vmatpush1.msra.mxu0 %v237
    %696 = vmatprep.subr.mxu0 0.0
    %697 = vmatpush1.msra.mxu0 %v236
    %698 = vmatprep.subr.mxu0 0.0
    %699 = vmatpush1.msra.mxu0 %v235
    %700 = vmatprep.subr.mxu0 0.0
    %701 = vmatpush1.msra.mxu0 %v234
    %702 = vmatprep.subr.mxu0 0.0
    %703 = vmatpush1.msra.mxu0 %v233
    %704 = vmatprep.subr.mxu0 0.0
    %705 = vmatpush1.msra.mxu0 %v232
    %706 = vmatprep.subr.mxu0 0.0
    %707 = vmatpush1.msra.mxu0 %v231
    %708 = vmatprep.subr.mxu0 0.0
    %709 = vmatpush1.msra.mxu0 %v230
    %710 = vmatprep.subr.mxu0 0.0
    %711 = vmatpush1.msra.mxu0 %v229
    %712 = vmatprep.subr.mxu0 0.0
    %713 = vmatpush1.msra.mxu0 %v228
    %714 = vmatprep.subr.mxu0 0.0
    %715 = vmatpush1.msra.mxu0 %v227
    %716 = vmatprep.subr.mxu0 0.0
    %717 = vmatpush1.msra.mxu0 %v226
    %718 = vmatprep.subr.mxu0 0.0
    %719 = vmatpush2.msra.mxu0 0.0
    %720 = vmatprep.subr.mxu0 0.0
    %721 = vmatpush2.msra.mxu0 0.0
    %722 = vmatprep.subr.mxu0 0.0
    %723 = vmatpush2.msra.mxu0 0.0
    %724 = vmatprep.subr.mxu0 0.0
    %725 = vmatpush2.msra.mxu0 0.0
    %726 = vmatprep.subr.mxu0 0.0
    %727 = vmatpush2.msra.mxu0 0.0
    %728 = vmatprep.subr.mxu0 0.0
    %729 = vmatpush2.msra.mxu0 0.0
    %730 = vmatprep.subr.mxu0 0.0
    %731 = vmatpush2.msra.mxu0 0.0
    %732 = vmatprep.subr.mxu0 0.0
    %733 = vmatpush2.msra.mxu0 0.0
    %734 = vmatprep.subr.mxu0 0.0
    %735 = vmatpush2.msra.mxu0 0.0
    %736 = vmatprep.subr.mxu0 0.0
    %737 = vmatpush2.msra.mxu0 0.0
    %738 = vmatprep.subr.mxu0 0.0
    %739 = vmatpush2.msra.mxu0 0.0
    %740 = vmatprep.subr.mxu0 0.0
    %741 = vmatpush2.msra.mxu0 0.0
    %742 = vmatprep.subr.mxu0 0.0
    %743 = vmatpush2.msra.mxu0 0.0
    %744 = vmatprep.subr.mxu0 0.0
    %745 = vmatpush2.msra.mxu0 0.0
    %746 = vmatprep.subr.mxu0 0.0
    %747 = vmatpush2.msra.mxu0 0.0
    %748 = vmatprep.subr.mxu0 0.0
    %749 = vmatpush2.msra.mxu0 0.0
    %750 = vmatprep.mubr.f32.mxu0 0.0
    %751 = vmatmul.mubr.f32.gmra.mxu0 %v683
    %v752 = vpop.f32.mrf.mxu0
    %v753 = vadd.f32 0.0, %v752
    %v754 = vpop.f32.mrf.mxu0
    %755 = vdwg.mxu0
    %v756 = vadd.f32 %v218, %v753
    %v757 = vtanh.pop %v756
    %s758 = scalar_lea.vmem [#allocation2], 48
    %759 = vst [vmem:[%s758] sm:$0xff] %v757
    %760 = vmatprep.subr.mxu0 0.0
    %761 = vmatpush1.msra.mxu0 %v241
    %762 = vmatprep.subr.mxu0 0.0
    %763 = vmatpush1.msra.mxu0 %v240
    %764 = vmatprep.subr.mxu0 0.0
    %765 = vmatpush1.msra.mxu0 %v239
    %766 = vmatprep.subr.mxu0 0.0
    %767 = vmatpush1.msra.mxu0 %v238
    %768 = vmatprep.subr.mxu0 0.0
    %769 = vmatpush1.msra.mxu0 %v237
    %770 = vmatprep.subr.mxu0 0.0
    %771 = vmatpush1.msra.mxu0 %v236
    %772 = vmatprep.subr.mxu0 0.0
    %773 = vmatpush1.msra.mxu0 %v235
    %774 = vmatprep.subr.mxu0 0.0
    %775 = vmatpush1.msra.mxu0 %v234
    %776 = vmatprep.subr.mxu0 0.0
    %777 = vmatpush1.msra.mxu0 %v233
    %778 = vmatprep.subr.mxu0 0.0
    %779 = vmatpush1.msra.mxu0 %v232
    %780 = vmatprep.subr.mxu0 0.0
    %781 = vmatpush1.msra.mxu0 %v231
    %782 = vmatprep.subr.mxu0 0.0
    %783 = vmatpush1.msra.mxu0 %v230
    %784 = vmatprep.subr.mxu0 0.0
    %785 = vmatpush1.msra.mxu0 %v229
    %786 = vmatprep.subr.mxu0 0.0
    %787 = vmatpush1.msra.mxu0 %v228
    %788 = vmatprep.subr.mxu0 0.0
    %789 = vmatpush1.msra.mxu0 %v227
    %790 = vmatprep.subr.mxu0 0.0
    %791 = vmatpush1.msra.mxu0 %v226
    %792 = vmatprep.subr.mxu0 0.0
    %793 = vmatpush2.msra.mxu0 0.0
    %794 = vmatprep.subr.mxu0 0.0
    %795 = vmatpush2.msra.mxu0 0.0
    %796 = vmatprep.subr.mxu0 0.0
    %797 = vmatpush2.msra.mxu0 0.0
    %798 = vmatprep.subr.mxu0 0.0
    %799 = vmatpush2.msra.mxu0 0.0
    %800 = vmatprep.subr.mxu0 0.0
    %801 = vmatpush2.msra.mxu0 0.0
    %802 = vmatprep.subr.mxu0 0.0
    %803 = vmatpush2.msra.mxu0 0.0
    %804 = vmatprep.subr.mxu0 0.0
    %805 = vmatpush2.msra.mxu0 0.0
    %806 = vmatprep.subr.mxu0 0.0
    %807 = vmatpush2.msra.mxu0 0.0
    %808 = vmatprep.subr.mxu0 0.0
    %809 = vmatpush2.msra.mxu0 0.0
    %810 = vmatprep.subr.mxu0 0.0
    %811 = vmatpush2.msra.mxu0 0.0
    %812 = vmatprep.subr.mxu0 0.0
    %813 = vmatpush2.msra.mxu0 0.0
    %814 = vmatprep.subr.mxu0 0.0
    %815 = vmatpush2.msra.mxu0 0.0
    %816 = vmatprep.subr.mxu0 0.0
    %817 = vmatpush2.msra.mxu0 0.0
    %818 = vmatprep.subr.mxu0 0.0
    %819 = vmatpush2.msra.mxu0 0.0
    %820 = vmatprep.subr.mxu0 0.0
    %821 = vmatpush2.msra.mxu0 0.0
    %822 = vmatprep.subr.mxu0 0.0
    %823 = vmatpush2.msra.mxu0 0.0
    %824 = vmatprep.mubr.f32.mxu0 0.0
    %825 = vmatmul.mubr.f32.gmra.mxu0 %v757
    %v826 = vpop.f32.mrf.mxu0
    %v827 = vadd.f32 0.0, %v826
    %v828 = vpop.f32.mrf.mxu0
    %829 = vdwg.mxu0
    %v830 = vadd.f32 %v223, %v827
    %v831 = vtanh.pop %v830
    %s832 = scalar_lea.vmem [#allocation2], 56
    %833 = vst [vmem:[%s832] sm:$0xff] %v831
    %834 = vst [vmem:[#allocation10] sm:$0xff] %v831
    %v835 = vld [vmem:[#allocation2] sm:$0xff]
    %v836 = vld [vmem:[#allocation2 + $0x8] sm:$0xff]
    %v837 = vld [vmem:[#allocation2 + $0x10] sm:$0xff]
    %v838 = vld [vmem:[#allocation2 + $0x18] sm:$0xff]
    %v839 = vld [vmem:[#allocation2 + $0x20] sm:$0xff]
    %v840 = vld [vmem:[#allocation2 + $0x28] sm:$0xff]
    %v841 = vld [vmem:[#allocation2 + $0x30] sm:$0xff]
    %v842 = vld [vmem:[#allocation2 + $0x38] sm:$0xff]
    %v843 = vld [vmem:[#allocation6] sm:$0xff]
    %v844 = vld [vmem:[#allocation6 + $0x8] sm:$0xff]
    %v845 = vld [vmem:[#allocation6 + $0x10] sm:$0xff]
    %v846 = vld [vmem:[#allocation6 + $0x18] sm:$0xff]
    %v847 = vld [vmem:[#allocation6 + $0x20] sm:$0xff]
    %v848 = vld [vmem:[#allocation6 + $0x28] sm:$0xff]
    %v849 = vld [vmem:[#allocation6 + $0x30] sm:$0xff]
    %v850 = vld [vmem:[#allocation6 + $0x38] sm:$0xff]
    %v851 = vld [vmem:[#allocation6 + $0x40] sm:$0xff]
    %v852 = vld [vmem:[#allocation6 + $0x48] sm:$0xff]
    %v853 = vld [vmem:[#allocation6 + $0x50] sm:$0xff]
    %v854 = vld [vmem:[#allocation6 + $0x58] sm:$0xff]
    %v855 = vld [vmem:[#allocation6 + $0x60] sm:$0xff]
    %v856 = vld [vmem:[#allocation6 + $0x68] sm:$0xff]
    %v857 = vld [vmem:[#allocation6 + $0x70] sm:$0xff]
    %v858 = vld [vmem:[#allocation6 + $0x78] sm:$0xff]
    %v859 = vld [vmem:[%s6] sm:$0x1]
    %v861 = vlaneseq
    %v862 = vshrl.u32 %v861, 7
    %v863 = vsub.s32 0, %v862
    %v864 = vrot.slane %v859, %v863
    %866 = vmatprep.subr.mxu0 0.0
    %867 = vmatpush1.msra.mxu0 %v858
    %868 = vmatprep.subr.mxu0 0.0
    %869 = vmatpush1.msra.mxu0 %v857
    %870 = vmatprep.subr.mxu0 0.0
    %871 = vmatpush1.msra.mxu0 %v856
    %872 = vmatprep.subr.mxu0 0.0
    %873 = vmatpush1.msra.mxu0 %v855
    %874 = vmatprep.subr.mxu0 0.0
    %875 = vmatpush1.msra.mxu0 %v854
    %876 = vmatprep.subr.mxu0 0.0
    %877 = vmatpush1.msra.mxu0 %v853
    %878 = vmatprep.subr.mxu0 0.0
    %879 = vmatpush1.msra.mxu0 %v852
    %880 = vmatprep.subr.mxu0 0.0
    %881 = vmatpush1.msra.mxu0 %v851
    %882 = vmatprep.subr.mxu0 0.0
    %883 = vmatpush1.msra.mxu0 %v850
    %884 = vmatprep.subr.mxu0 0.0
    %885 = vmatpush1.msra.mxu0 %v849
    %886 = vmatprep.subr.mxu0 0.0
    %887 = vmatpush1.msra.mxu0 %v848
    %888 = vmatprep.subr.mxu0 0.0
    %889 = vmatpush1.msra.mxu0 %v847
    %890 = vmatprep.subr.mxu0 0.0
    %891 = vmatpush1.msra.mxu0 %v846
    %892 = vmatprep.subr.mxu0 0.0
    %893 = vmatpush1.msra.mxu0 %v845
    %894 = vmatprep.subr.mxu0 0.0
    %895 = vmatpush1.msra.mxu0 %v844
    %896 = vmatprep.subr.mxu0 0.0
    %897 = vmatpush1.msra.mxu0 %v843
    %898 = vmatprep.subr.mxu0 0.0
    %899 = vmatpush2.msra.mxu0 0.0
    %900 = vmatprep.subr.mxu0 0.0
    %901 = vmatpush2.msra.mxu0 0.0
    %902 = vmatprep.subr.mxu0 0.0
    %903 = vmatpush2.msra.mxu0 0.0
    %904 = vmatprep.subr.mxu0 0.0
    %905 = vmatpush2.msra.mxu0 0.0
    %906 = vmatprep.subr.mxu0 0.0
    %907 = vmatpush2.msra.mxu0 0.0
    %908 = vmatprep.subr.mxu0 0.0
    %909 = vmatpush2.msra.mxu0 0.0
    %910 = vmatprep.subr.mxu0 0.0
    %911 = vmatpush2.msra.mxu0 0.0
    %912 = vmatprep.subr.mxu0 0.0
    %913 = vmatpush2.msra.mxu0 0.0
    %914 = vmatprep.subr.mxu0 0.0
    %915 = vmatpush2.msra.mxu0 0.0
    %916 = vmatprep.subr.mxu0 0.0
    %917 = vmatpush2.msra.mxu0 0.0
    %918 = vmatprep.subr.mxu0 0.0
    %919 = vmatpush2.msra.mxu0 0.0
    %920 = vmatprep.subr.mxu0 0.0
    %921 = vmatpush2.msra.mxu0 0.0
    %922 = vmatprep.subr.mxu0 0.0
    %923 = vmatpush2.msra.mxu0 0.0
    %924 = vmatprep.subr.mxu0 0.0
    %925 = vmatpush2.msra.mxu0 0.0
    %926 = vmatprep.subr.mxu0 0.0
    %927 = vmatpush2.msra.mxu0 0.0
    %928 = vmatprep.subr.mxu0 0.0
    %929 = vmatpush2.msra.mxu0 0.0
    %930 = vmatprep.mubr.f32.mxu0 0.0
    %931 = vmatmul.mubr.f32.gmra.mxu0 %v835
    %v932 = vpop.f32.mrf.mxu0
    %v933 = vadd.f32 %v864, %v932
    %v934 = vpop.f32.mrf.mxu0
    %935 = vmatprep.mubr.f32.mxu0 0.0
    %936 = vmatmul.mubr.f32.gmra.mxu0 %v836
    %v937 = vpop.f32.mrf.mxu0
    %v938 = vadd.f32 %v864, %v937
    %v939 = vpop.f32.mrf.mxu0
    %940 = vmatprep.mubr.f32.mxu0 0.0
    %941 = vmatmul.mubr.f32.gmra.mxu0 %v837
    %v942 = vpop.f32.mrf.mxu0
    %v943 = vadd.f32 %v864, %v942
    %v944 = vpop.f32.mrf.mxu0
    %945 = vmatprep.mubr.f32.mxu0 0.0
    %946 = vmatmul.mubr.f32.gmra.mxu0 %v838
    %v947 = vpop.f32.mrf.mxu0
    %v948 = vadd.f32 %v864, %v947
    %v949 = vpop.f32.mrf.mxu0
    %950 = vmatprep.mubr.f32.mxu0 0.0
    %951 = vmatmul.mubr.f32.gmra.mxu0 %v839
    %v952 = vpop.f32.mrf.mxu0
    %v953 = vadd.f32 %v864, %v952
    %v954 = vpop.f32.mrf.mxu0
    %955 = vmatprep.mubr.f32.mxu0 0.0
    %956 = vmatmul.mubr.f32.gmra.mxu0 %v840
    %v957 = vpop.f32.mrf.mxu0
    %v958 = vadd.f32 %v864, %v957
    %v959 = vpop.f32.mrf.mxu0
    %960 = vmatprep.mubr.f32.mxu0 0.0
    %961 = vmatmul.mubr.f32.gmra.mxu0 %v841
    %v962 = vpop.f32.mrf.mxu0
    %v963 = vadd.f32 %v864, %v962
    %v964 = vpop.f32.mrf.mxu0
    %965 = vmatprep.mubr.f32.mxu0 0.0
    %966 = vmatmul.mubr.f32.gmra.mxu0 %v842
    %v967 = vpop.f32.mrf.mxu0
    %v968 = vadd.f32 %v864, %v967
    %v969 = vpop.f32.mrf.mxu0
    %970 = vdwg.mxu0
    %v971 = vmax.f32 %v933, 0.0
    %v972 = vmax.f32 %v938, 0.0
    %v973 = vmax.f32 %v943, 0.0
    %v974 = vmax.f32 %v948, 0.0
    %v975 = vmax.f32 %v953, 0.0
    %v976 = vmax.f32 %v958, 0.0
    %v977 = vmax.f32 %v963, 0.0
    %v978 = vmax.f32 %v968, 0.0
    %v979 = vld [vmem:[#allocation8] sm:$0xff]
    %v980 = vld [vmem:[#allocation8 + $0x8] sm:$0xff]
    %v981 = vld [vmem:[#allocation8 + $0x10] sm:$0xff]
    %v982 = vld [vmem:[#allocation8 + $0x18] sm:$0xff]
    %v983 = vld [vmem:[#allocation8 + $0x20] sm:$0xff]
    %v984 = vld [vmem:[#allocation8 + $0x28] sm:$0xff]
    %v985 = vld [vmem:[#allocation8 + $0x30] sm:$0xff]
    %v986 = vld [vmem:[#allocation8 + $0x38] sm:$0xff]
    %v987 = vld [vmem:[#allocation8 + $0x40] sm:$0xff]
    %v988 = vld [vmem:[#allocation8 + $0x48] sm:$0xff]
    %v989 = vld [vmem:[#allocation8 + $0x50] sm:$0xff]
    %v990 = vld [vmem:[#allocation8 + $0x58] sm:$0xff]
    %v991 = vld [vmem:[#allocation8 + $0x60] sm:$0xff]
    %v992 = vld [vmem:[#allocation8 + $0x68] sm:$0xff]
    %v993 = vld [vmem:[#allocation8 + $0x70] sm:$0xff]
    %v994 = vld [vmem:[#allocation8 + $0x78] sm:$0xff]
    %v995 = vld [vmem:[%s8] sm:$0x1]
    %v997 = vlaneseq
    %v998 = vshrl.u32 %v997, 7
    %v999 = vsub.s32 0, %v998
    %v1000 = vrot.slane %v995, %v999
    %1002 = vmatprep.subr.mxu0 0.0
    %1003 = vmatpush1.msra.mxu0 %v994
    %1004 = vmatprep.subr.mxu0 0.0
    %1005 = vmatpush1.msra.mxu0 %v993
    %1006 = vmatprep.subr.mxu0 0.0
    %1007 = vmatpush1.msra.mxu0 %v992
    %1008 = vmatprep.subr.mxu0 0.0
    %1009 = vmatpush1.msra.mxu0 %v991
    %1010 = vmatprep.subr.mxu0 0.0
    %1011 = vmatpush1.msra.mxu0 %v990
    %1012 = vmatprep.subr.mxu0 0.0
    %1013 = vmatpush1.msra.mxu0 %v989
    %1014 = vmatprep.subr.mxu0 0.0
    %1015 = vmatpush1.msra.mxu0 %v988
    %1016 = vmatprep.subr.mxu0 0.0
    %1017 = vmatpush1.msra.mxu0 %v987
    %1018 = vmatprep.subr.mxu0 0.0
    %1019 = vmatpush1.msra.mxu0 %v986
    %1020 = vmatprep.subr.mxu0 0.0
    %1021 = vmatpush1.msra.mxu0 %v985
    %1022 = vmatprep.subr.mxu0 0.0
    %1023 = vmatpush1.msra.mxu0 %v984
    %1024 = vmatprep.subr.mxu0 0.0
    %1025 = vmatpush1.msra.mxu0 %v983
    %1026 = vmatprep.subr.mxu0 0.0
    %1027 = vmatpush1.msra.mxu0 %v982
    %1028 = vmatprep.subr.mxu0 0.0
    %1029 = vmatpush1.msra.mxu0 %v981
    %1030 = vmatprep.subr.mxu0 0.0
    %1031 = vmatpush1.msra.mxu0 %v980
    %1032 = vmatprep.subr.mxu0 0.0
    %1033 = vmatpush1.msra.mxu0 %v979
    %1034 = vmatprep.subr.mxu0 0.0
    %1035 = vmatpush2.msra.mxu0 0.0
    %1036 = vmatprep.subr.mxu0 0.0
    %1037 = vmatpush2.msra.mxu0 0.0
    %1038 = vmatprep.subr.mxu0 0.0
    %1039 = vmatpush2.msra.mxu0 0.0
    %1040 = vmatprep.subr.mxu0 0.0
    %1041 = vmatpush2.msra.mxu0 0.0
    %1042 = vmatprep.subr.mxu0 0.0
    %1043 = vmatpush2.msra.mxu0 0.0
    %1044 = vmatprep.subr.mxu0 0.0
    %1045 = vmatpush2.msra.mxu0 0.0
    %1046 = vmatprep.subr.mxu0 0.0
    %1047 = vmatpush2.msra.mxu0 0.0
    %1048 = vmatprep.subr.mxu0 0.0
    %1049 = vmatpush2.msra.mxu0 0.0
    %1050 = vmatprep.subr.mxu0 0.0
    %1051 = vmatpush2.msra.mxu0 0.0
    %1052 = vmatprep.subr.mxu0 0.0
    %1053 = vmatpush2.msra.mxu0 0.0
    %1054 = vmatprep.subr.mxu0 0.0
    %1055 = vmatpush2.msra.mxu0 0.0
    %1056 = vmatprep.subr.mxu0 0.0
    %1057 = vmatpush2.msra.mxu0 0.0
    %1058 = vmatprep.subr.mxu0 0.0
    %1059 = vmatpush2.msra.mxu0 0.0
    %1060 = vmatprep.subr.mxu0 0.0
    %1061 = vmatpush2.msra.mxu0 0.0
    %1062 = vmatprep.subr.mxu0 0.0
    %1063 = vmatpush2.msra.mxu0 0.0
    %1064 = vmatprep.subr.mxu0 0.0
    %1065 = vmatpush2.msra.mxu0 0.0
    %1066 = vmatprep.mubr.f32.mxu0 0.0
    %1067 = vmatmul.mubr.f32.gmra.mxu0 %v971
    %v1068 = vpop.f32.mrf.mxu0
    %v1069 = vadd.f32 %v1000, %v1068
    %v1070 = vpop.f32.mrf.mxu0
    %1071 = vmatprep.mubr.f32.mxu0 0.0
    %1072 = vmatmul.mubr.f32.gmra.mxu0 %v972
    %v1073 = vpop.f32.mrf.mxu0
    %v1074 = vadd.f32 %v1000, %v1073
    %v1075 = vpop.f32.mrf.mxu0
    %1076 = vmatprep.mubr.f32.mxu0 0.0
    %1077 = vmatmul.mubr.f32.gmra.mxu0 %v973
    %v1078 = vpop.f32.mrf.mxu0
    %v1079 = vadd.f32 %v1000, %v1078
    %v1080 = vpop.f32.mrf.mxu0
    %1081 = vmatprep.mubr.f32.mxu0 0.0
    %1082 = vmatmul.mubr.f32.gmra.mxu0 %v974
    %v1083 = vpop.f32.mrf.mxu0
    %v1084 = vadd.f32 %v1000, %v1083
    %v1085 = vpop.f32.mrf.mxu0
    %1086 = vmatprep.mubr.f32.mxu0 0.0
    %1087 = vmatmul.mubr.f32.gmra.mxu0 %v975
    %v1088 = vpop.f32.mrf.mxu0
    %v1089 = vadd.f32 %v1000, %v1088
    %v1090 = vpop.f32.mrf.mxu0
    %1091 = vmatprep.mubr.f32.mxu0 0.0
    %1092 = vmatmul.mubr.f32.gmra.mxu0 %v976
    %v1093 = vpop.f32.mrf.mxu0
    %v1094 = vadd.f32 %v1000, %v1093
    %v1095 = vpop.f32.mrf.mxu0
    %1096 = vmatprep.mubr.f32.mxu0 0.0
    %1097 = vmatmul.mubr.f32.gmra.mxu0 %v977
    %v1098 = vpop.f32.mrf.mxu0
    %v1099 = vadd.f32 %v1000, %v1098
    %v1100 = vpop.f32.mrf.mxu0
    %1101 = vmatprep.mubr.f32.mxu0 0.0
    %1102 = vmatmul.mubr.f32.gmra.mxu0 %v978
    %v1103 = vpop.f32.mrf.mxu0
    %v1104 = vadd.f32 %v1000, %v1103
    %v1105 = vpop.f32.mrf.mxu0
    %1106 = vdwg.mxu0
    %1107 = vst [vmem:[#allocation9] sm:$0xff] %v1069
    %1108 = vst [vmem:[#allocation9 + $0x8] sm:$0xff] %v1074
    %1109 = vst [vmem:[#allocation9 + $0x10] sm:$0xff] %v1079
    %1110 = vst [vmem:[#allocation9 + $0x18] sm:$0xff] %v1084
    %1111 = vst [vmem:[#allocation9 + $0x20] sm:$0xff] %v1089
    %1112 = vst [vmem:[#allocation9 + $0x28] sm:$0xff] %v1094
    %1113 = vst [vmem:[#allocation9 + $0x30] sm:$0xff] %v1099
    %1114 = vst [vmem:[#allocation9 + $0x38] sm:$0xff] %v1104
    // Predicated region
    $region50: #{tpu_custom_call.1} parent=1 // pred_check
      _
    $region51: #{tpu_custom_call.1} parent=1 // pred_check_branch
      %1116 = sbr.rel (0) target = $region53
    $region52: #{tpu_custom_call.1} parent=1 // pred_region
      %s1118 = ssub.s32 1024, 1024
      %1119 = vsyncadd [#allocation5], %s1118
      %s1120 = sshll.u32 [#allocation9], 4
      %s1121 = int_to_ptr.vmem [resolvable:$true] %s1120
      %1126 = dma.vmem_to_hbm [thread:$0]  %s1121, 1024, %s9, [#allocation5], 128, 128, 8
    $region53: #{tpu_custom_call.1} parent=1 // pred_fallthru
      _
    // Predicated region
    $region54: #{tpu_custom_call.1} parent=1 // pred_check
      _
    $region55: #{tpu_custom_call.1} parent=1 // pred_check_branch
      %1128 = sbr.rel (0) target = $region57
    $region56: #{tpu_custom_call.1} parent=1 // pred_region
      %s1130 = ssub.s32 128, 128
      %1131 = vsyncadd [#allocation11], %s1130
      %s1133 = sshll.u32 [#allocation10], 4
      %s1134 = int_to_ptr.vmem [resolvable:$true] %s1133
      %1136 = dma.vmem_to_hbm [thread:$0]  %s1134, 128, %s10, [#allocation11]
    $region57: #{tpu_custom_call.1} parent=1 // pred_fallthru
      _
    // Predicated region
    $region58: #{tpu_custom_call.1} parent=1 // pred_check
      _
    $region59: #{tpu_custom_call.1} parent=1 // pred_check_branch
      %1138 = sbr.rel (0) target = $region61
    $region60: #{tpu_custom_call.1} parent=1 // pred_region
      %1139 = dma.done [#allocation5], 1024
    $region61: #{tpu_custom_call.1} parent=1 // pred_fallthru
      _
    // Predicated region
    $region62: #{tpu_custom_call.1} parent=1 // pred_check
      _
    $region63: #{tpu_custom_call.1} parent=1 // pred_check_branch
      %1141 = sbr.rel (0) target = $region65
    $region64: #{tpu_custom_call.1} parent=1 // pred_region
      %1142 = dma.done [#allocation11], 128
    $region65: #{tpu_custom_call.1} parent=1 // pred_fallthru
      _
    %1143 = vsyncpa [#allocation4], 1
    %1144 = vsyncpa [#allocation7], 1
    %1145 = vsyncpa [#allocation5], 1
    %1146 = vsyncpa [#allocation11], 1

</llo_original>
